<compile_context>
chip_gen: v7x
topology: tpu7x:2x2x1
jax: 0.10.0
libtpu: 0.0.40
codegen_flags: <defaults>
</compile_context>

<pallas_src>
import jax
import jax.numpy as jnp
from jax.experimental import pallas as pl
from jax.experimental.pallas import tpu as pltpu

_VREG_ELEMS = 8 * 128  # one f32 vreg worth of elements


def _sigmoid_kernel(x_ref, o_ref):
    # Whole tile resident in VMEM; logistic rides the EUP slot.
    o_ref[...] = jax.nn.sigmoid(x_ref[...])


@jax.jit
def sigmoid_pallas(x):
    """Elementwise sigmoid on an NCHW tensor via one gridless Pallas call on a
    fully lane/sublane-dense (8, cols) slab (padded to a vreg multiple)."""
    orig_shape = x.shape
    total = x.size

    # Pad the flat length up to a multiple of 1024 (8 sublanes x 128 lanes)
    # so the slab consists only of full, unmasked vregs.  The pad/slice fuse
    # with neighbors inside this jit.
    padded = ((total + _VREG_ELEMS - 1) // _VREG_ELEMS) * _VREG_ELEMS
    rows, cols = 8, padded // 8

    flat = x.reshape(total)
    if padded != total:
        flat = jnp.pad(flat, (0, padded - total))
    x2d = flat.reshape(rows, cols)

    out2d = pl.pallas_call(
        _sigmoid_kernel,
        out_shape=jax.ShapeDtypeStruct((rows, cols), x.dtype),
        # Gridless whole-array blocks pinned to VMEM: no grid loop, no
        # index_map, single DMA in / single DMA out.
        in_specs=[pl.BlockSpec(memory_space=pltpu.MemorySpace.VMEM)],
        out_specs=pl.BlockSpec(memory_space=pltpu.MemorySpace.VMEM),
        # Elementwise, identical shape/dtype -> output reuses the input buffer.
        input_output_aliases={0: 0},
        # Scheduling hint: trivially cheap custom call.
        cost_estimate=pl.CostEstimate(
            flops=padded,
            transcendentals=padded,
            bytes_accessed=2 * padded * x.dtype.itemsize,
        ),
    )(x2d)

    return out2d.reshape(padded)[:total].reshape(orig_shape)


if __name__ == "__main__":
    key = jax.random.PRNGKey(0)
    # Same shape as the PyTorch module's input: [1, 1200, 1, 1]
    x394 = jax.random.normal(key, (1, 1200, 1, 1), dtype=jnp.float32)

    out = sigmoid_pallas(x394)
    jax.block_until_ready(out)

    # Sanity check against plain JAX reference.
    ref = jax.nn.sigmoid(x394)
    assert out.shape == (1, 1200, 1, 1)
    assert jnp.allclose(out, ref, atol=1e-6), "mismatch vs reference sigmoid"

    print("KERNEL_OK")
</pallas_src>

<mosaic_0001>
module attributes {stable_mosaic.version = 11 : i64} {
  func.func @_sigmoid_kernel(%arg0: memref<8x256xf32, #tpu.memory_space<vmem>>, %arg1: memref<8x256xf32, #tpu.memory_space<vmem>>) attributes {dimension_semantics = [], scalar_prefetch = 0 : i64, scratch_operands = 0 : i64, tpu.core_type = #tpu.core_type<tc>} {
    %c0 = arith.constant 0 : index
    %c0_0 = arith.constant 0 : index
    %0 = vector.load %arg0[%c0, %c0_0] : memref<8x256xf32, #tpu.memory_space<vmem>>, vector<8x256xf32>
    %1 = arith.negf %0 : vector<8x256xf32>
    %2 = math.exp %1 : vector<8x256xf32>
    %cst = arith.constant 1.000000e+00 : f32
    %3 = vector.broadcast %cst : f32 to vector<8x256xf32>
    %4 = arith.addf %3, %2 : vector<8x256xf32>
    %5 = arith.divf %3, %4 : vector<8x256xf32>
    %c0_1 = arith.constant 0 : index
    %c0_2 = arith.constant 0 : index
    %6 = vector.load %arg1[%c0_1, %c0_2] : memref<8x256xf32, #tpu.memory_space<vmem>>, vector<8x256xf32>
    tpu.vector_store %arg1[%c0_1, %c0_2], %5 {strides = array<i32>} : memref<8x256xf32, #tpu.memory_space<vmem>>, vector<8x256xf32>,
    return
  }
}

</mosaic_0001>

<llo_original>
// kernel: sigmoid_pallas.1
$region0: #{sigmoid_pallas.1}
  #allocation0 [shape = 'u32[]', space=smem, size = 0x4, offset = 0x4, fixed_abs, tag = 'smem constant byte address 0x4 - core index']
  #allocation1 [shape = 'u32[144,128]{1,0:T(1,128)}', space=vmem, size = 0x12000, scoped, tag = 'internal scratch']
  %s0 = inlined_call_operand.vmem [shape: f32[8,256], index: 0, kind: input, shape index: {}, may-alias: {0,1}]
  %s1 = inlined_call_operand.vmem [shape: f32[8,256], index: 1, kind: output, shape index: {}, may-alias: {0,1}]
  %s2 = sld [smem:[#allocation0]]
  $region14: #{sigmoid_pallas.1} parent=0
    _
  %s4 = ssub.s32 1, %s2
  %s5 = scalar_select 0, %s4, %s2
  // Predicated region
  $region2: #{sigmoid_pallas.1} parent=0 // pred_check
    _
  $region3: #{sigmoid_pallas.1} parent=0 // pred_check_branch
    %7 = sbr.rel (0) target = $region5
  $region4: #{sigmoid_pallas.1} parent=0 // pred_region
    _
  $region5: #{sigmoid_pallas.1} parent=0 // pred_fallthru
    _
  %v8 = vld [vmem:[%s0] sm:$0xff]
  %v9 = vld [vmem:[%s0 + $0x8] sm:$0xff]
  %v10 = vxor.u32 %v8, 2147483648
  %v11 = vxor.u32 %v9, 2147483648
  %v12 = vmul.f32 %v10, 1.442695
  %v13 = vpow.pop %v12
  %v14 = vmul.f32 %v11, 1.442695
  %v15 = vpow.pop %v14
  %v16 = vadd.f32 %v13, 1.0
  %v17 = vadd.f32 %v15, 1.0
  %v18 = vrcp.pop %v16
  %v19 = vmul.f32 1.0, %v18
  %v20 = vrcp.pop %v17
  %v21 = vmul.f32 1.0, %v20
  %22 = vst [vmem:[%s1] sm:$0xff] %v19
  %23 = vst [vmem:[%s1 + $0x8] sm:$0xff] %v21
  // Predicated region
  $region6: #{sigmoid_pallas.1} parent=0 // pred_check
    _
  $region7: #{sigmoid_pallas.1} parent=0 // pred_check_branch
    %25 = sbr.rel (0) target = $region9
  $region8: #{sigmoid_pallas.1} parent=0 // pred_region
    _
  $region9: #{sigmoid_pallas.1} parent=0 // pred_fallthru
    _
  // Predicated region
  $region10: #{sigmoid_pallas.1} parent=0 // pred_check
    _
  $region11: #{sigmoid_pallas.1} parent=0 // pred_check_branch
    %27 = sbr.rel (0) target = $region13
  $region12: #{sigmoid_pallas.1} parent=0 // pred_region
    _
  $region13: #{sigmoid_pallas.1} parent=0 // pred_fallthru
    _

</llo_original>
